<compile_context>
chip_gen: v7x
topology: tpu7x:2x2x1
jax: 0.10.0
libtpu: 0.0.40
codegen_flags: <defaults>
</compile_context>

<pallas_src>
import functools

import jax
import jax.numpy as jnp
from jax.experimental import pallas as pl
from jax.experimental.pallas import tpu as pltpu


_LANE = 128
_FUSED_SLAB_BYTES = 8 * 1024 * 1024     # per-batch (C, HW) slab cap for the fused path
_FUSED_VMEM_LIMIT = 48 * 1024 * 1024    # in-flight ~4*slab + params <= 40 MiB (< v7x 64 MiB)
_STREAM_BLOCK_BYTES = 4 * 1024 * 1024   # per-block cap for the streaming fallback
_STREAM_VMEM_LIMIT = 32 * 1024 * 1024   # 2*(in+out) blocks ~ 16 MiB + headroom


def _sigmoid_f32(x):
    return 1.0 / (1.0 + jnp.exp(-x))


def _mlp_gate(pooled, w1_ref, b1_ref, w2t_ref, b2_ref):
    """pooled (C, 1) f32 -> gate (C, 1) f32.  BN is pre-folded into w1/b1.

    Implemented as broadcast-multiplies + sublane/lane reduces (no transposes,
    no tiny MXU matmuls): C and mip are small, so this is a handful of VPU/XLU
    vregs hidden under the slab DMA.
    """
    # 1x1 conv #1 (+ folded BN) :  h[m] = sum_c w1[c, m] * pooled[c] + b1[m]
    h = jnp.sum(w1_ref[...] * pooled, axis=0, keepdims=True) + b1_ref[...]      # (1, mip)
    h = jnp.maximum(h, 0.0)                                                     # ReLU
    # 1x1 conv #2 :  s[c] = sum_m w2t[c, m] * h[m] + b2[c]
    s = jnp.sum(w2t_ref[...] * h, axis=1, keepdims=True) + b2_ref[...]          # (C, 1)
    return _sigmoid_f32(s)                                                      # (C, 1)


# ---------------------------------------------------------------------------
# Primary: fused pool + MLP + gate, one pass over x per batch.
# ---------------------------------------------------------------------------
def _se_fused_kernel(inv_hw, x_ref, w1_ref, b1_ref, w2t_ref, b2_ref, o_ref):
    # x_ref block: (1, C, HW); params full-extent; o_ref block: (1, C, HW).
    pooled = jnp.sum(x_ref[0], axis=-1, keepdims=True, dtype=jnp.float32) * inv_hw   # (C, 1)
    gate = _mlp_gate(pooled, w1_ref, b1_ref, w2t_ref, b2_ref)                        # (C, 1)
    # Re-read the VMEM-resident block (cheap) rather than keeping a huge live value
    # across the MLP; (C, HW) * (C, 1) is a lane broadcast.
    o_ref[0] = x_ref[0] * gate.astype(o_ref.dtype)


# ---------------------------------------------------------------------------
# Fallback pass 1: streamed pooling, gate computed in the final grid step.
# ---------------------------------------------------------------------------
def _pool_gate_kernel(inv_hw, x_ref, w1_ref, b1_ref, w2t_ref, b2_ref, g_ref, sum_sc):
    # x_ref block: (1, C, T); g_ref block: (1, C, 1), resident across t.
    t = pl.program_id(1)

    @pl.when(t == 0)
    def _():
        sum_sc[...] = jnp.zeros_like(sum_sc)

    sum_sc[...] += jnp.sum(x_ref[0], axis=-1, keepdims=True, dtype=jnp.float32)

    @pl.when(t == pl.num_programs(1) - 1)
    def _():
        gate = _mlp_gate(sum_sc[...] * inv_hw, w1_ref, b1_ref, w2t_ref, b2_ref)
        g_ref[0] = gate.astype(g_ref.dtype)


# ---------------------------------------------------------------------------
# Fallback pass 2: broadcast the per-(batch, channel) gate over the stream.
# ---------------------------------------------------------------------------
def _gate_mul_kernel(x_ref, g_ref, o_ref):
    o_ref[0] = x_ref[0] * g_ref[0]          # (C, T) * (C, 1): lane broadcast


# ---------------------------------------------------------------------------
# Wrapper helpers.
# ---------------------------------------------------------------------------
def _round_up(x, m):
    return (x + m - 1) // m * m


def _pick_hw_tile(hw, c, itemsize, n_batch, max_block_bytes=_STREAM_BLOCK_BYTES):
    """Lane-dense spatial tile: <= max_block_bytes, and small enough that
    N * n_hw >= ~8 grid steps (dual-TC sharding on v7x + pipelining)."""
    hw128 = _round_up(hw, _LANE)
    budget = max(_LANE, (max_block_bytes // max(1, c * itemsize)) // _LANE * _LANE)
    min_steps = max(2, -(-8 // max(1, n_batch)))                 # ceil(8 / N), >= 2
    par_cap = max(_LANE, (hw128 // min_steps) // _LANE * _LANE)
    return min(hw128, budget, par_cap)


def _fold_bn_params(w1, bn_gamma, bn_beta, bn_mean, bn_var, w2, b2, eps):
    """Fold inference BN into conv1; return kernel-layout f32 params."""
    scale = bn_gamma / jnp.sqrt(bn_var + eps)                            # (mip,)
    w1_eff = (w1 * scale[None, :]).astype(jnp.float32)                   # (C, mip)
    b1_eff = (bn_beta - bn_mean * scale)[None, :].astype(jnp.float32)    # (1, mip)
    w2t = w2.T.astype(jnp.float32)                                       # (C, mip)
    b2_col = b2[:, None].astype(jnp.float32)                             # (C, 1)
    return w1_eff, b1_eff, w2t, b2_col


def se_forward(x_nchw, w1, bn_gamma, bn_beta, bn_mean, bn_var, w2, b2,
               eps=1e-5, max_fused_slab_bytes=_FUSED_SLAB_BYTES):
    """x_nchw: (N, C, H, W).  Returns (N, C, H, W)."""
    N, C, H, W = x_nchw.shape
    HW = H * W
    itemsize = jnp.dtype(x_nchw.dtype).itemsize
    inv_hw = 1.0 / HW
    mip = w1.shape[1]

    w1_eff, b1_eff, w2t, b2_col = _fold_bn_params(
        w1, bn_gamma, bn_beta, bn_mean, bn_var, w2, b2, eps)

    # Free view: NCHW -> (N, C, HW).  HW on the lane axis, no transpose.
    x3 = x_nchw.reshape(N, C, HW)

    def _param_specs(index_map):
        return [
            pl.BlockSpec((C, mip), index_map),   # w1_eff
            pl.BlockSpec((1, mip), index_map),   # b1_eff
            pl.BlockSpec((C, mip), index_map),   # w2t
            pl.BlockSpec((C, 1), index_map),     # b2_col
        ]

    slab_bytes = C * HW * itemsize

    # ---------------- Fused single-pass path (2x|x| HBM traffic) ----------------
    if slab_bytes <= max_fused_slab_bytes:
        out3 = pl.pallas_call(
            functools.partial(_se_fused_kernel, inv_hw),
            out_shape=jax.ShapeDtypeStruct((N, C, HW), x_nchw.dtype),
            grid_spec=pltpu.PrefetchScalarGridSpec(
                num_scalar_prefetch=0,
                grid=(N,),
                in_specs=[pl.BlockSpec((1, C, HW), lambda b: (b, 0, 0))]
                + _param_specs(lambda b: (0, 0)),
                out_specs=pl.BlockSpec((1, C, HW), lambda b: (b, 0, 0)),
            ),
            compiler_params=pltpu.CompilerParams(
                dimension_semantics=("parallel",),
                vmem_limit_bytes=_FUSED_VMEM_LIMIT,
            ),
            cost_estimate=pl.CostEstimate(
                flops=2 * N * C * HW,
                transcendentals=N * mip,
                bytes_accessed=2 * N * C * HW * itemsize,
            ),
        )(x3, w1_eff, b1_eff, w2t, b2_col)
        return out3.reshape(N, C, H, W)

    # ---------------- Streaming two-pass fallback (oversized slabs) -------------
    hw_tile = _pick_hw_tile(HW, C, itemsize, N)
    hw_pad = _round_up(HW, hw_tile)
    # Zero-pad the spatial axis to a multiple of the tile: exact for the mean
    # (divide by the true HW below) and the padded gate output is sliced away.
    x3p = jnp.pad(x3, ((0, 0), (0, 0), (0, hw_pad - HW))) if hw_pad != HW else x3
    n_hw = hw_pad // hw_tile

    # Pass 1: pooled sum -> in-kernel MLP epilogue -> gate (N, C, 1).
    gate = pl.pallas_call(
        functools.partial(_pool_gate_kernel, inv_hw),
        out_shape=jax.ShapeDtypeStruct((N, C, 1), x_nchw.dtype),
        grid_spec=pltpu.PrefetchScalarGridSpec(
            num_scalar_prefetch=0,
            grid=(N, n_hw),
            in_specs=[pl.BlockSpec((1, C, hw_tile), lambda b, t: (b, 0, t))]
            + _param_specs(lambda b, t: (0, 0)),
            out_specs=pl.BlockSpec((1, C, 1), lambda b, t: (b, 0, 0)),
            scratch_shapes=[pltpu.VMEM((C, 1), jnp.float32)],
        ),
        compiler_params=pltpu.CompilerParams(
            dimension_semantics=("parallel", "arbitrary"),
            vmem_limit_bytes=_STREAM_VMEM_LIMIT,
        ),
        cost_estimate=pl.CostEstimate(
            flops=N * C * hw_pad,
            transcendentals=N * mip,
            bytes_accessed=N * C * hw_pad * itemsize + N * C * itemsize,
        ),
    )(x3p, w1_eff, b1_eff, w2t, b2_col)

    # Pass 2: gate the spatial stream.
    # NOTE: input_output_aliases={0: 0} would let XLA reuse x's buffer when x is
    # dead after this op; left off because callers (and the tests) still need x.
    out3p = pl.pallas_call(
        _gate_mul_kernel,
        out_shape=jax.ShapeDtypeStruct((N, C, hw_pad), x_nchw.dtype),
        grid_spec=pltpu.PrefetchScalarGridSpec(
            num_scalar_prefetch=0,
            grid=(N, n_hw),
            in_specs=[
                pl.BlockSpec((1, C, hw_tile), lambda b, t: (b, 0, t)),
                pl.BlockSpec((1, C, 1), lambda b, t: (b, 0, 0)),
            ],
            out_specs=pl.BlockSpec((1, C, hw_tile), lambda b, t: (b, 0, t)),
        ),
        compiler_params=pltpu.CompilerParams(
            dimension_semantics=("parallel", "parallel"),
            vmem_limit_bytes=_STREAM_VMEM_LIMIT,
        ),
        cost_estimate=pl.CostEstimate(
            flops=N * C * hw_pad,
            transcendentals=0,
            bytes_accessed=2 * N * C * hw_pad * itemsize + N * C * itemsize,
        ),
    )(x3p, gate)

    out3 = out3p[:, :, :HW] if hw_pad != HW else out3p
    return out3.reshape(N, C, H, W)


def se_reference(x_nchw, w1, bn_gamma, bn_beta, bn_mean, bn_var, w2, b2, eps=1e-5):
    """Pure-JAX reference of the PyTorch forward (inference-mode BN)."""
    pooled = jnp.mean(x_nchw, axis=(2, 3), keepdims=True)        # (N, C, 1, 1)
    p = pooled[:, :, 0, 0]                                       # (N, C)
    h = p @ w1                                                   # (N, mip)
    h = (h - bn_mean) / jnp.sqrt(bn_var + eps) * bn_gamma + bn_beta
    h = jnp.maximum(h, 0.0)
    s = h @ w2 + b2                                              # (N, C)
    gate = jax.nn.sigmoid(s)[:, :, None, None]
    return x_nchw * gate


if __name__ == "__main__":
    key = jax.random.PRNGKey(0)
    N, C, H, W = 2, 4, 16, 16          # planes = 4
    mip = max(8, C // 16)              # = 8

    k = jax.random.split(key, 8)
    x = jax.random.normal(k[0], (N, C, H, W), dtype=jnp.float32)

    # Deterministic synthetic parameters (shapes match the nn.Module __init__).
    # Conv weights stored as matmul matrices: w1 (C, mip), w2 (mip, C).
    w1 = jax.random.normal(k[1], (C, mip), dtype=jnp.float32) * 0.1
    w2 = jax.random.normal(k[2], (mip, C), dtype=jnp.float32) * 0.1
    b2 = jax.random.normal(k[3], (C,), dtype=jnp.float32) * 0.1
    bn_gamma = jnp.ones((mip,), dtype=jnp.float32) + 0.05 * jax.random.normal(k[4], (mip,))
    bn_beta = 0.05 * jax.random.normal(k[5], (mip,), dtype=jnp.float32)
    bn_mean = 0.05 * jax.random.normal(k[6], (mip,), dtype=jnp.float32)
    bn_var = jnp.abs(jax.random.normal(k[7], (mip,), dtype=jnp.float32)) * 0.1 + 0.9

    params = (w1, bn_gamma, bn_beta, bn_mean, bn_var, w2, b2)
    ref = se_reference(x, *params)

    # 1) Fused single-pass path (default for MobileNet-sized slabs).
    out_fused = jax.block_until_ready(se_forward(x, *params))
    assert out_fused.shape == (N, C, H, W)
    assert jnp.allclose(out_fused, ref, atol=1e-5, rtol=1e-5), "fused path mismatch"

    # 2) Streaming two-pass fallback (forced): exercises HW tiling, the scratch
    #    accumulator, and the in-kernel MLP epilogue.
    out_stream = jax.block_until_ready(se_forward(x, *params, max_fused_slab_bytes=0))
    assert jnp.allclose(out_stream, ref, atol=1e-5, rtol=1e-5), "two-pass path mismatch"

    # 3) Non-multiple-of-128 spatial size: fused path (full-extent block) and the
    #    fallback's zero-pad-to-lane path.
    x2 = jax.random.normal(k[0], (1, C, 10, 10), dtype=jnp.float32)
    ref2 = se_reference(x2, *params)
    out2_fused = jax.block_until_ready(se_forward(x2, *params))
    out2_stream = jax.block_until_ready(se_forward(x2, *params, max_fused_slab_bytes=0))
    assert jnp.allclose(out2_fused, ref2, atol=1e-5, rtol=1e-5), "fused HW=100 mismatch"
    assert jnp.allclose(out2_stream, ref2, atol=1e-5, rtol=1e-5), "padded fallback mismatch"

    print("KERNEL_OK")
</pallas_src>

<mosaic_0001>
module attributes {stable_mosaic.version = 11 : i64} {
  func.func @_se_fused_kernel(%arg0: i32, %arg1: memref<1x4x256xf32, #tpu.memory_space<vmem>>, %arg2: memref<4x8xf32, #tpu.memory_space<vmem>>, %arg3: memref<1x8xf32, #tpu.memory_space<vmem>>, %arg4: memref<4x8xf32, #tpu.memory_space<vmem>>, %arg5: memref<4x1xf32, #tpu.memory_space<vmem>>, %arg6: memref<1x4x256xf32, #tpu.memory_space<vmem>>) attributes {dimension_semantics = [#tpu.dimension_semantics<parallel>], iteration_bounds = array<i64: 2>, scalar_prefetch = 0 : i64, scratch_operands = 0 : i64, tpu.core_type = #tpu.core_type<tc>, window_params = [{transform_indices = @transform_0, window_bounds = array<i64: 1, 4, 256>}, {pipeline_mode = #tpu.pipeline_mode<synchronous>, transform_indices = @transform_1, window_bounds = array<i64: 4, 8>}, {pipeline_mode = #tpu.pipeline_mode<synchronous>, transform_indices = @transform_2, window_bounds = array<i64: 1, 8>}, {pipeline_mode = #tpu.pipeline_mode<synchronous>, transform_indices = @transform_3, window_bounds = array<i64: 4, 8>}, {pipeline_mode = #tpu.pipeline_mode<synchronous>, transform_indices = @transform_4, window_bounds = array<i64: 4, 1>}, {transform_indices = @transform_5, window_bounds = array<i64: 1, 4, 256>}]} {
    %c0 = arith.constant 0 : index
    %c0_0 = arith.constant 0 : index
    %c0_1 = arith.constant 0 : index
    %0 = vector.load %arg1[%c0, %c0_0, %c0_1] : memref<1x4x256xf32, #tpu.memory_space<vmem>>, vector<1x4x256xf32>
    %1 = vector.shape_cast %0 : vector<1x4x256xf32> to vector<4x256xf32>
    %cst = arith.constant dense<0.000000e+00> : vector<4xf32>
    %2 = vector.multi_reduction <add>, %1, %cst [1] : vector<4x256xf32> to vector<4xf32>
    %3 = vector.shape_cast %2 : vector<4xf32> to vector<4x1xf32>
    %cst_2 = arith.constant 3.906250e-03 : f32
    %4 = vector.broadcast %cst_2 : f32 to vector<4x1xf32>
    %5 = arith.mulf %3, %4 : vector<4x1xf32>
    %c0_3 = arith.constant 0 : index
    %c0_4 = arith.constant 0 : index
    %6 = vector.load %arg2[%c0_3, %c0_4] : memref<4x8xf32, #tpu.memory_space<vmem>>, vector<4x8xf32>
    %7 = vector.broadcast %5 : vector<4x1xf32> to vector<4x8xf32>
    %8 = arith.mulf %6, %7 : vector<4x8xf32>
    %cst_5 = arith.constant dense<0.000000e+00> : vector<8xf32>
    %9 = vector.multi_reduction <add>, %8, %cst_5 [0] : vector<4x8xf32> to vector<8xf32>
    %10 = vector.shape_cast %9 : vector<8xf32> to vector<1x8xf32>
    %c0_6 = arith.constant 0 : index
    %c0_7 = arith.constant 0 : index
    %11 = vector.load %arg3[%c0_6, %c0_7] : memref<1x8xf32, #tpu.memory_space<vmem>>, vector<1x8xf32>
    %12 = arith.addf %10, %11 : vector<1x8xf32>
    %cst_8 = arith.constant 0.000000e+00 : f32
    %13 = vector.broadcast %cst_8 : f32 to vector<1x8xf32>
    %14 = arith.maximumf %12, %13 : vector<1x8xf32>
    %c0_9 = arith.constant 0 : index
    %c0_10 = arith.constant 0 : index
    %15 = vector.load %arg4[%c0_9, %c0_10] : memref<4x8xf32, #tpu.memory_space<vmem>>, vector<4x8xf32>
    %16 = vector.broadcast %14 : vector<1x8xf32> to vector<4x8xf32>
    %17 = arith.mulf %15, %16 : vector<4x8xf32>
    %cst_11 = arith.constant dense<0.000000e+00> : vector<4xf32>
    %18 = vector.multi_reduction <add>, %17, %cst_11 [1] : vector<4x8xf32> to vector<4xf32>
    %19 = vector.shape_cast %18 : vector<4xf32> to vector<4x1xf32>
    %c0_12 = arith.constant 0 : index
    %c0_13 = arith.constant 0 : index
    %20 = vector.load %arg5[%c0_12, %c0_13] : memref<4x1xf32, #tpu.memory_space<vmem>>, vector<4x1xf32>
    %21 = arith.addf %19, %20 : vector<4x1xf32>
    %cst_14 = arith.constant 0.000000e+00 : f32
    %22 = vector.broadcast %cst_14 : f32 to vector<4x1xf32>
    %23 = arith.subf %22, %21 : vector<4x1xf32>
    %24 = math.exp %23 : vector<4x1xf32>
    %cst_15 = arith.constant 1.000000e+00 : f32
    %25 = vector.broadcast %cst_15 : f32 to vector<4x1xf32>
    %26 = arith.addf %25, %24 : vector<4x1xf32>
    %cst_16 = arith.constant 1.000000e+00 : f32
    %27 = vector.broadcast %cst_16 : f32 to vector<4x1xf32>
    %28 = arith.divf %27, %26 : vector<4x1xf32>
    %c0_17 = arith.constant 0 : index
    %c0_18 = arith.constant 0 : index
    %c0_19 = arith.constant 0 : index
    %29 = vector.load %arg1[%c0_17, %c0_18, %c0_19] : memref<1x4x256xf32, #tpu.memory_space<vmem>>, vector<1x4x256xf32>
    %30 = vector.shape_cast %29 : vector<1x4x256xf32> to vector<4x256xf32>
    %31 = vector.broadcast %28 : vector<4x1xf32> to vector<4x256xf32>
    %32 = arith.mulf %30, %31 : vector<4x256xf32>
    %c0_20 = arith.constant 0 : index
    %c0_21 = arith.constant 0 : index
    %c0_22 = arith.constant 0 : index
    %33 = vector.load %arg6[%c0_20, %c0_21, %c0_22] : memref<1x4x256xf32, #tpu.memory_space<vmem>>, vector<1x4x256xf32>
    %34 = vector.shape_cast %33 : vector<1x4x256xf32> to vector<4x256xf32>
    %35 = vector.shape_cast %32 : vector<4x256xf32> to vector<1x4x256xf32>
    tpu.vector_store %arg6[%c0_20, %c0_21, %c0_22], %35 {strides = array<i32>} : memref<1x4x256xf32, #tpu.memory_space<vmem>>, vector<1x4x256xf32>,
    return
  }
  func.func @transform_0(%arg0: i32) -> (i32, i32, i32) {
    %c0_i32 = arith.constant 0 : i32
    %c0_i32_0 = arith.constant 0 : i32
    %c0_i32_1 = arith.constant 0 : i32
    return %arg0, %c0_i32, %c0_i32_0 : i32, i32, i32
  }
  func.func @transform_1(%arg0: i32) -> (i32, i32) {
    %c0_i32 = arith.constant 0 : i32
    %c0_i32_0 = arith.constant 0 : i32
    %c0_i32_1 = arith.constant 0 : i32
    return %c0_i32, %c0_i32_0 : i32, i32
  }
  func.func @transform_2(%arg0: i32) -> (i32, i32) {
    %c0_i32 = arith.constant 0 : i32
    %c0_i32_0 = arith.constant 0 : i32
    %c0_i32_1 = arith.constant 0 : i32
    return %c0_i32, %c0_i32_0 : i32, i32
  }
  func.func @transform_3(%arg0: i32) -> (i32, i32) {
    %c0_i32 = arith.constant 0 : i32
    %c0_i32_0 = arith.constant 0 : i32
    %c0_i32_1 = arith.constant 0 : i32
    return %c0_i32, %c0_i32_0 : i32, i32
  }
  func.func @transform_4(%arg0: i32) -> (i32, i32) {
    %c0_i32 = arith.constant 0 : i32
    %c0_i32_0 = arith.constant 0 : i32
    %c0_i32_1 = arith.constant 0 : i32
    return %c0_i32, %c0_i32_0 : i32, i32
  }
  func.func @transform_5(%arg0: i32) -> (i32, i32, i32) {
    %c0_i32 = arith.constant 0 : i32
    %c0_i32_0 = arith.constant 0 : i32
    %c0_i32_1 = arith.constant 0 : i32
    return %arg0, %c0_i32, %c0_i32_0 : i32, i32, i32
  }
}

</mosaic_0001>

<llo_original>
// kernel: tpu_custom_call.1
$region0: #{tpu_custom_call.1}
  #allocation0 [shape = 'u32[]', space=smem, size = 0x4, offset = 0x4, fixed_abs, tag = 'smem constant byte address 0x4 - core index']
  #allocation1 [shape = 'u32[144,128]{1,0:T(1,128)}', space=vmem, size = 0x12000, scoped, tag = 'internal scratch']
  %s0 = inlined_call_operand.hbm [shape: f32[2,4,256], index: 0, kind: input, shape index: {}]
  %s1 = inlined_call_operand.vmem [shape: f32[4,8], index: 1, kind: input, shape index: {}]
  %s2 = inlined_call_operand.vmem [shape: f32[1,8], index: 2, kind: input, shape index: {}]
  %s3 = inlined_call_operand.vmem [shape: f32[4,8], index: 3, kind: input, shape index: {}]
  %s4 = inlined_call_operand.vmem [shape: f32[4,1], index: 4, kind: input, shape index: {}]
  %s5 = inlined_call_operand.hbm [shape: f32[2,4,256], index: 5, kind: output, shape index: {}]
  %s6 = sld [smem:[#allocation0]]
  $region57: #{tpu_custom_call.1} parent=0
    _
  %s8 = ssub.s32 1, %s6
  %s9 = scalar_select 0, %s8, %s6
  $region1: #{tpu_custom_call.1} parent=0
    #allocation2 [shape = 'u8[8192]{0}', space=vmem, size = 0x2000, scoped, tag = 'input window, operand 0']
    #allocation3 [shape = 's32[2]{0}', space=sflag, size = 0x8, scoped, tag = 'scoped memory for tpu_custom_call.1']
    #allocation4 [shape = 's32[2]{0}', space=sflag, size = 0x8, scoped, tag = 'scoped memory for tpu_custom_call.1']
    #allocation5 [shape = 'u8[8192]{0}', space=vmem, size = 0x2000, scoped, tag = 'output window, operand 0']
    %10 = vsyncpa [#allocation3], 0
    %s11 = scalar_lea.sflag [#allocation3], 1
    %12 = vsyncpa %s11, 0
    %13 = vsyncpa [#allocation4], 0
    %s14 = scalar_lea.sflag [#allocation4], 1
    %15 = vsyncpa %s14, 0
    loop: start=0, step=1, limit=4
    $region2: #{tpu_custom_call.1} parent=1 // loop_pre_header
      _
    $region3: #{tpu_custom_call.1} parent=1 // loop_header
      %s17 = sphi 0, %s21
      %p18 = scmp.ge.s32.totalorder %s17, 4
      %s27 = sphi 0, %s29
      %s30 = sphi 0, %s27
      %s31 = sphi 0, %s30
      %s47 = sphi 0, %s31
      %s51 = sphi 0, %s51
      %s53 = sphi 0, %s51
      %s54 = sphi 0, %s53
      %s68 = sphi 0, %s54
      %s72 = sphi 0, %s72
      %s74 = sphi 0, %s72
      %s75 = sphi 0, %s74
      %s89 = sphi 0, %s75
      %s93 = sphi 0, %s93
      %s95 = sphi 0, %s93
      %s96 = sphi 0, %s95
      %s110 = sphi 0, %s96
      %s114 = sphi 0, %s114
      %s116 = sphi 0, %s114
      %s117 = sphi 0, %s116
      %s131 = sphi 0, %s117
      %s137 = sphi 0, %s139
      %s140 = sphi 0, %s137
      %s141 = sphi 0, %s140
      %s157 = sphi 0, %s141
    $region4: #{tpu_custom_call.1} parent=1 // loop_header_branch
      %20 = sbr.rel (%p18) target = $region8
    $region5: #{tpu_custom_call.1} parent=1 // loop_body
      %s22 = ssub.s32 %s17, 1
      %s23 = ssub.s32 %s17, 2
      %s24 = sadd.s32 %s17, 1
      %s25 = ssub.s32 %s17, %s24
      %p26 = scmp.eq.s32.totalorder %s25, 0
      %s28 = sadd.s32 %s27, 1
      %s29 = scalar_select %p26, %s27, %s28
      %p32 = pneg %p26
      %p33 = scmp.eq.s32.totalorder %s17, 1
      %p34 = por %p32, %p33
      %p35 = scmp.ne.s32.totalorder %s27, %s30
      %p36 = scmp.eq.s32.totalorder %s17, 0
      %p37 = por %p35, %p36
      %p38 = scmp.ne.s32.totalorder %s27, %s30
      %p39 = scmp.eq.s32.totalorder %s22, 1
      %p40 = por %p38, %p39
      %p41 = scmp.ne.s32.totalorder %s30, %s31
      %p42 = scmp.eq.s32.totalorder %s22, 0
      %p43 = por %p41, %p42
      %p44 = scmp.ne.s32.totalorder %s30, %s31
      %p45 = scmp.eq.s32.totalorder %s23, 1
      %p46 = por %p44, %p45
      %p48 = scmp.ne.s32.totalorder %s31, %s47
      %p49 = scmp.eq.s32.totalorder %s23, 0
      %p50 = por %p48, %p49
      %s52 = sadd.s32 %s51, 1
      %p55 = scmp.eq.s32.totalorder %s17, 1
      %p56 = scmp.ne.s32.totalorder %s51, %s53
      %p57 = scmp.eq.s32.totalorder %s17, 0
      %p58 = por %p56, %p57
      %p59 = scmp.ne.s32.totalorder %s51, %s53
      %p60 = scmp.eq.s32.totalorder %s22, 1
      %p61 = por %p59, %p60
      %p62 = scmp.ne.s32.totalorder %s53, %s54
      %p63 = scmp.eq.s32.totalorder %s22, 0
      %p64 = por %p62, %p63
      %p65 = scmp.ne.s32.totalorder %s53, %s54
      %p66 = scmp.eq.s32.totalorder %s23, 1
      %p67 = por %p65, %p66
      %p69 = scmp.ne.s32.totalorder %s54, %s68
      %p70 = scmp.eq.s32.totalorder %s23, 0
      %p71 = por %p69, %p70
      %s73 = sadd.s32 %s72, 1
      %p76 = scmp.eq.s32.totalorder %s17, 1
      %p77 = scmp.ne.s32.totalorder %s72, %s74
      %p78 = scmp.eq.s32.totalorder %s17, 0
      %p79 = por %p77, %p78
      %p80 = scmp.ne.s32.totalorder %s72, %s74
      %p81 = scmp.eq.s32.totalorder %s22, 1
      %p82 = por %p80, %p81
      %p83 = scmp.ne.s32.totalorder %s74, %s75
      %p84 = scmp.eq.s32.totalorder %s22, 0
      %p85 = por %p83, %p84
      %p86 = scmp.ne.s32.totalorder %s74, %s75
      %p87 = scmp.eq.s32.totalorder %s23, 1
      %p88 = por %p86, %p87
      %p90 = scmp.ne.s32.totalorder %s75, %s89
      %p91 = scmp.eq.s32.totalorder %s23, 0
      %p92 = por %p90, %p91
      %s94 = sadd.s32 %s93, 1
      %p97 = scmp.eq.s32.totalorder %s17, 1
      %p98 = scmp.ne.s32.totalorder %s93, %s95
      %p99 = scmp.eq.s32.totalorder %s17, 0
      %p100 = por %p98, %p99
      %p101 = scmp.ne.s32.totalorder %s93, %s95
      %p102 = scmp.eq.s32.totalorder %s22, 1
      %p103 = por %p101, %p102
      %p104 = scmp.ne.s32.totalorder %s95, %s96
      %p105 = scmp.eq.s32.totalorder %s22, 0
      %p106 = por %p104, %p105
      %p107 = scmp.ne.s32.totalorder %s95, %s96
      %p108 = scmp.eq.s32.totalorder %s23, 1
      %p109 = por %p107, %p108
      %p111 = scmp.ne.s32.totalorder %s96, %s110
      %p112 = scmp.eq.s32.totalorder %s23, 0
      %p113 = por %p111, %p112
      %s115 = sadd.s32 %s114, 1
      %p118 = scmp.eq.s32.totalorder %s17, 1
      %p119 = scmp.ne.s32.totalorder %s114, %s116
      %p120 = scmp.eq.s32.totalorder %s17, 0
      %p121 = por %p119, %p120
      %p122 = scmp.ne.s32.totalorder %s114, %s116
      %p123 = scmp.eq.s32.totalorder %s22, 1
      %p124 = por %p122, %p123
      %p125 = scmp.ne.s32.totalorder %s116, %s117
      %p126 = scmp.eq.s32.totalorder %s22, 0
      %p127 = por %p125, %p126
      %p128 = scmp.ne.s32.totalorder %s116, %s117
      %p129 = scmp.eq.s32.totalorder %s23, 1
      %p130 = por %p128, %p129
      %p132 = scmp.ne.s32.totalorder %s117, %s131
      %p133 = scmp.eq.s32.totalorder %s23, 0
      %p134 = por %p132, %p133
      %s135 = ssub.s32 %s17, %s24
      %p136 = scmp.eq.s32.totalorder %s135, 0
      %s138 = sadd.s32 %s137, 1
      %s139 = scalar_select %p136, %s137, %s138
      %p142 = pneg %p136
      %p143 = scmp.eq.s32.totalorder %s17, 1
      %p144 = por %p142, %p143
      %p145 = scmp.ne.s32.totalorder %s137, %s140
      %p146 = scmp.eq.s32.totalorder %s17, 0
      %p147 = por %p145, %p146
      %p148 = scmp.ne.s32.totalorder %s137, %s140
      %p149 = scmp.eq.s32.totalorder %s22, 1
      %p150 = por %p148, %p149
      %p151 = scmp.ne.s32.totalorder %s140, %s141
      %p152 = scmp.eq.s32.totalorder %s22, 0
      %p153 = por %p151, %p152
      %p154 = scmp.ne.s32.totalorder %s140, %s141
      %p155 = scmp.eq.s32.totalorder %s23, 1
      %p156 = por %p154, %p155
      %p158 = scmp.ne.s32.totalorder %s141, %s157
      %p159 = scmp.eq.s32.totalorder %s23, 0
      %p160 = por %p158, %p159
      %p161 = scmp.le.s32.totalorder 1, %s17
      %p162 = scmp.lt.s32.totalorder %s17, 3
      %p163 = pnand %p161, %p162
      %p164 = pneg %p163
      // Predicated region
      $region9: #{tpu_custom_call.1} parent=5 // pred_check
        _
      $region10: #{tpu_custom_call.1} parent=5 // pred_check_branch
        %166 = sbr.rel (%p163) target = $region12
      $region11: #{tpu_custom_call.1} parent=5 // pred_region
        %s167 = ssub.s32 %s17, 1
        // Predicated region
        $region13: #{tpu_custom_call.1} parent=11 // pred_check
          %p168 = pneg %p64
        $region14: #{tpu_custom_call.1} parent=11 // pred_check_branch
          %170 = sbr.rel (%p168) target = $region16
        $region15: #{tpu_custom_call.1} parent=11 // pred_region
          _
        $region16: #{tpu_custom_call.1} parent=11 // pred_fallthru
          _
        // Predicated region
        $region17: #{tpu_custom_call.1} parent=11 // pred_check
          %p171 = pneg %p85
        $region18: #{tpu_custom_call.1} parent=11 // pred_check_branch
          %173 = sbr.rel (%p171) target = $region20
        $region19: #{tpu_custom_call.1} parent=11 // pred_region
          _
        $region20: #{tpu_custom_call.1} parent=11 // pred_fallthru
          _
        // Predicated region
        $region21: #{tpu_custom_call.1} parent=11 // pred_check
          %p174 = pneg %p106
        $region22: #{tpu_custom_call.1} parent=11 // pred_check_branch
          %176 = sbr.rel (%p174) target = $region24
        $region23: #{tpu_custom_call.1} parent=11 // pred_region
          _
        $region24: #{tpu_custom_call.1} parent=11 // pred_fallthru
          _
        // Predicated region
        $region25: #{tpu_custom_call.1} parent=11 // pred_check
          %p177 = pneg %p127
        $region26: #{tpu_custom_call.1} parent=11 // pred_check_branch
          %179 = sbr.rel (%p177) target = $region28
        $region27: #{tpu_custom_call.1} parent=11 // pred_region
          _
        $region28: #{tpu_custom_call.1} parent=11 // pred_fallthru
          _
      $region12: #{tpu_custom_call.1} parent=5 // pred_fallthru
        _
      %p180 = scmp.lt.s32.totalorder %s17, 2
      // Predicated region
      $region29: #{tpu_custom_call.1} parent=5 // pred_check
        %p181 = pneg %p180
      $region30: #{tpu_custom_call.1} parent=5 // pred_check_branch
        %183 = sbr.rel (%p181) target = $region32
      $region31: #{tpu_custom_call.1} parent=5 // pred_region
        // Predicated region
        $region33: #{tpu_custom_call.1} parent=31 // pred_check
          %p184 = pneg %p37
        $region34: #{tpu_custom_call.1} parent=31 // pred_check_branch
          %186 = sbr.rel (%p184) target = $region36
        $region35: #{tpu_custom_call.1} parent=31 // pred_region
          %s187 = sand.u32 %s27, 1
          %s188 = scalar_lea.sflag [#allocation3], %s187
          %s189 = sand.u32 %s27, 1
          %s190 = smul.addr %s189, 8
          %s191 = scalar_lea.vmem [#allocation2], %s190
          %s193 = ssub.s32 128, 128
          %194 = vsyncadd %s188, %s193
          %s195 = smul.addr %s17, 2
          %s196 = smul.addr %s195, 64
          %s197 = scalar_lea.hbm %s0, %s196
          %s199 = sshll.u32 %s191, 4
          %s200 = int_to_ptr.vmem [resolvable:$true] %s199
          %202 = dma.hbm_to_vmem [thread:$0]  %s197, 128, %s200, %s188
        $region36: #{tpu_custom_call.1} parent=31 // pred_fallthru
          _
      $region32: #{tpu_custom_call.1} parent=5 // pred_fallthru
        _
      %p203 = scmp.le.s32.totalorder 1, %s17
      %p204 = scmp.lt.s32.totalorder %s17, 3
      %p205 = pnand %p203, %p204
      %p206 = pneg %p205
      // Predicated region
      $region37: #{tpu_custom_call.1} parent=5 // pred_check
        _
      $region38: #{tpu_custom_call.1} parent=5 // pred_check_branch
        %208 = sbr.rel (%p205) target = $region40
      $region39: #{tpu_custom_call.1} parent=5 // pred_region
        %s209 = ssub.s32 %s17, 1
        %s210 = sand.u32 %s30, 1
        %s211 = scalar_lea.sflag [#allocation3], %s210
        %s212 = sand.u32 %s30, 1
        %s213 = smul.addr %s212, 8
        %s214 = scalar_lea.vmem [#allocation2], %s213
        // Predicated region
        $region41: #{tpu_custom_call.1} parent=39 // pred_check
          %p215 = pneg %p43
        $region42: #{tpu_custom_call.1} parent=39 // pred_check_branch
          %217 = sbr.rel (%p215) target = $region44
        $region43: #{tpu_custom_call.1} parent=39 // pred_region
          %218 = dma.done %s211, 128
        $region44: #{tpu_custom_call.1} parent=39 // pred_fallthru
          _
        %s219 = sand.u32 %s30, 1
        %s220 = scalar_lea.sflag [#allocation3], %s219
        %s221 = sand.u32 %s30, 1
        %s222 = smul.addr %s221, 8
        %s223 = scalar_lea.vmem [#allocation2], %s222
        %p224 = pneg %p43
        %p225 = pneg %p40
        %p226 = pneg %p64
        %p227 = pneg %p61
        %p228 = pneg %p85
        %p229 = pneg %p82
        %p230 = pneg %p106
        %p231 = pneg %p103
        %p232 = pneg %p127
        %p233 = pneg %p124
        %p234 = pneg %p153
        %p235 = pneg %p150
        %s236 = sand.u32 %s140, 1
        %s237 = scalar_lea.sflag [#allocation4], %s236
        %s238 = sand.u32 %s140, 1
        %s239 = smul.addr %s238, 8
        %s240 = scalar_lea.vmem [#allocation5], %s239
        %v241 = vld [vmem:[%s214] sm:$0xff]
        %v243 = vcombine.high %v241, %v241
        %vm245 = vcmask 1043456
        %v246 = vsel %vm245, %v241, 0.0
        %v247 = vsel %vm245, %v243, 0.0
        %v248 = vadd.f32 %v246, %v247
        %249 = vadd.xlane.f32.xlu0 %v248
        %v250 = vpop.xlane.xlu0 %249
        %v251 = vmul.f32 %v250, 0.00390625
        %v252 = vld [vmem:[%s1] sm:$0xf]
        %v253 = vmul.f32 %v252, %v251
        %vm254 = vcmask 60416
        %v255 = vsel %vm254, %v253, 0.0
        %v256 = vrot.slane %v255, 4
        %v257 = vadd.f32 %v255, %v256
        %v258 = vrot.slane %v257, 2
        %v259 = vadd.f32 %v257, %v258
        %v260 = vrot.slane %v259, 1
        %v261 = vadd.f32 %v259, %v260
        %v262 = vld [vmem:[%s2] sm:$0x1]
        %v263 = vadd.f32 %v261, %v262
        %v264 = vmax.f32 %v263, 0.0
        %v265 = vld [vmem:[%s3] sm:$0xf]
        %v266 = vlaneseq
        %v267 = vshrl.u32 %v266, 7
        %v268 = vsub.s32 0, %v267
        %v269 = vrot.slane %v264, %v268
        %v270 = vmul.f32 %v265, %v269
        %v271 = vsel %vm254, %v270, 0.0
        %272 = vadd.xlane.f32.xlu0 %v271
        %v273 = vpop.xlane.xlu0 %272
        %v274 = vld [vmem:[%s4] sm:$0xf]
        %v275 = vadd.f32 %v273, %v274
        %v276 = vsub.f32 0.0, %v275
        %v277 = vmul.f32 %v276, 1.442695
        %v278 = vpow.pop %v277
        %v279 = vadd.f32 %v278, 1.0
        %v280 = vrcp.pop %v279
        %v281 = vmul.f32 1.0, %v280
        %283 = vset.pattern.permute.xlu0 0
        %284 = vperm.xlu0 %283, %v281
        %v285 = vpop.permute.xlu0 %284
        %v287 = vunpack.c.l.s4 839922192
        %v288 = vunpack.c.0.s8 %v287
        %v289 = vlaneseq
        %v290 = vshrl.u32 %v289, 7
        %v291 = vsub.s32 %v288, %v290
        %v292 = vrot.slane %v285, %v291
        %v294 = vmul.f32 %v241, %v292
        %295 = vst [vmem:[%s240] sm:$0xff] %v294
        %s296 = sand.u32 %s140, 1
        %s297 = scalar_lea.sflag [#allocation4], %s296
        %s298 = sand.u32 %s140, 1
        %s299 = smul.addr %s298, 8
        %s300 = scalar_lea.vmem [#allocation5], %s299
        // Predicated region
        $region45: #{tpu_custom_call.1} parent=39 // pred_check
          %p301 = pneg %p150
        $region46: #{tpu_custom_call.1} parent=39 // pred_check_branch
          %303 = sbr.rel (%p301) target = $region48
        $region47: #{tpu_custom_call.1} parent=39 // pred_region
          %s305 = ssub.s32 128, 128
          %306 = vsyncadd %s297, %s305
          %s307 = smul.addr %s22, 2
          %s308 = smul.addr %s307, 64
          %s309 = scalar_lea.hbm %s5, %s308
          %s311 = sshll.u32 %s300, 4
          %s312 = int_to_ptr.vmem [resolvable:$true] %s311
          %314 = dma.vmem_to_hbm [thread:$0]  %s312, 128, %s309, %s297
        $region48: #{tpu_custom_call.1} parent=39 // pred_fallthru
          _
      $region40: #{tpu_custom_call.1} parent=5 // pred_fallthru
        _
      %p315 = scmp.le.s32.totalorder 2, %s17
      // Predicated region
      $region49: #{tpu_custom_call.1} parent=5 // pred_check
        %p316 = pneg %p315
      $region50: #{tpu_custom_call.1} parent=5 // pred_check_branch
        %318 = sbr.rel (%p316) target = $region52
      $region51: #{tpu_custom_call.1} parent=5 // pred_region
        %s319 = ssub.s32 %s17, 2
        // Predicated region
        $region53: #{tpu_custom_call.1} parent=51 // pred_check
          %p320 = pneg %p156
        $region54: #{tpu_custom_call.1} parent=51 // pred_check_branch
          %322 = sbr.rel (%p320) target = $region56
        $region55: #{tpu_custom_call.1} parent=51 // pred_region
          %s323 = sand.u32 %s141, 1
          %s324 = scalar_lea.sflag [#allocation4], %s323
          %s325 = sand.u32 %s141, 1
          %s326 = smul.addr %s325, 8
          %s327 = scalar_lea.vmem [#allocation5], %s326
          %328 = dma.done %s324, 128
        $region56: #{tpu_custom_call.1} parent=51 // pred_fallthru
          _
      $region52: #{tpu_custom_call.1} parent=5 // pred_fallthru
        _
    $region6: #{tpu_custom_call.1} parent=1 // loop_footer
      %s21 = sadd.s32 1, %s17
    $region7: #{tpu_custom_call.1} parent=1 // loop_footer_branch
      %16 = sbr.rel target = $region3
    $region8: #{tpu_custom_call.1} parent=1 // loop_exit
      _
    %329 = vsyncpa [#allocation3], 1
    %s330 = scalar_lea.sflag [#allocation3], 1
    %331 = vsyncpa %s330, 1
    %332 = vsyncpa [#allocation4], 1
    %s333 = scalar_lea.sflag [#allocation4], 1
    %334 = vsyncpa %s333, 1

</llo_original>
